<compile_context>
chip_gen: v5e
topology: v5e:2x2
jax: 0.10.0
libtpu: 0.0.40
codegen_flags: <defaults>
</compile_context>

<pallas_src>
import functools

import numpy as np
import jax
import jax.numpy as jnp
from jax.experimental import pallas as pl
from jax.experimental.pallas import tpu as pltpu


def _double_conv_kernel(x_ref, w1_ref, b1_ref, w2_ref, b2_ref, o_ref, hpad_ref,
                        *, H, W, Cout):
    """Fused conv3x3+ReLU -> conv3x3+ReLU for one batch element.

    x_ref:    (1, H+2, (W+2)*Cin)   padded input rows, channels interleaved on lanes
    w1_ref:   (3, (W+2)*Cin,  W*Cout) banded weights of conv1 (one matrix per ky)
    b1_ref:   (1, W*Cout)           bias of conv1 in lane layout
    w2_ref:   (3, (W+2)*Cout, W*Cout) banded weights of conv2
    b2_ref:   (1, W*Cout)           bias of conv2 in lane layout
    o_ref:    (1, H, W*Cout)        lane-dense output slab
    hpad_ref: (H+2, (W+2)*Cout)     VMEM scratch for the padded intermediate
    """
    WCo = W * Cout

    # ---- Stage 1: conv1 as 3 row-banded MXU matmuls, bias + ReLU fused ----
    acc = jnp.zeros((H, WCo), jnp.float32)
    for ky in range(3):                                       # static unroll
        acc += jnp.dot(x_ref[0, ky:ky + H, :], w1_ref[ky],
                       preferred_element_type=jnp.float32)
    h = jnp.maximum(acc + b1_ref[...], 0.0)

    # ---- Intermediate stays in VMEM: zero the padded scratch, write interior ----
    hpad_ref[...] = jnp.zeros(hpad_ref.shape, hpad_ref.dtype)
    hpad_ref[1:H + 1, :WCo] = h                               # lane-aligned store

    # ---- Stage 2: conv2 + bias + ReLU, lane-dense output store ----
    acc2 = jnp.zeros((H, WCo), jnp.float32)
    for ky in range(3):
        acc2 += jnp.dot(hpad_ref[ky:ky + H, :], w2_ref[ky],
                        preferred_element_type=jnp.float32)
    o_ref[0] = jnp.maximum(acc2 + b2_ref[...], 0.0).astype(o_ref.dtype)


def _banded_weights(w_oihw, W):
    """(Cout, Cin, 3, 3) -> (3, (W+2)*Cin, W*Cout) banded matrices.

    Row layout per image row: lanes [x*Cin + ci] for x in [0, W), followed by
    2*Cin zero-padding lanes.  band[ky] folds the channel contraction and the
    three horizontal taps so that
        conv2d(x, w, padding=1)[y, x*Cout+co] == sum_ky (xrows[y+ky, :] @ band[ky])
    """
    Cout, Cin, KH, KW = w_oihw.shape
    wt = jnp.transpose(w_oihw, (2, 3, 1, 0))          # (KH, KW, Cin, Cout)
    bands = []
    for ky in range(KH):
        m = jnp.zeros(((W + 2) * Cin, W * Cout), w_oihw.dtype)
        for kx in range(KW):
            # Static selection matrix: P[r, x] = 1 iff stored block r feeds
            # output column x for this horizontal tap (blocks W, W+1 are zeros).
            P = np.zeros((W + 2, W), np.float32)
            for x in range(W):
                xin = x + kx - 1                       # input column (padding=1)
                r = xin if 0 <= xin < W else (W if xin < 0 else W + 1)
                P[r, x] = 1.0
            m = m + jnp.kron(jnp.asarray(P, w_oihw.dtype), wt[ky, kx])
        bands.append(m)
    return jnp.stack(bands)                            # (3, (W+2)*Cin, W*Cout)


@jax.jit
def double_conv_forward(x_nchw, w1, b1, w2, b2):
    """Matches DoubleConv.forward: NCHW in, NCHW out — single fused Pallas call."""
    N, Cin, H, W = x_nchw.shape
    Cout = w1.shape[0]
    WCo = W * Cout

    # One-time boundary glue (tiny): NCHW -> padded channels-interleaved rows.
    x_rows = jnp.pad(jnp.transpose(x_nchw, (0, 2, 3, 1)),
                     ((0, 0), (1, 1), (0, 2), (0, 0))
                     ).reshape(N, H + 2, (W + 2) * Cin)

    band1 = _banded_weights(w1, W)                     # (3, (W+2)*Cin,  W*Cout)
    band2 = _banded_weights(w2, W)                     # (3, (W+2)*Cout, W*Cout)
    b1_l = jnp.tile(b1, W).reshape(1, WCo)             # bias in lane layout
    b2_l = jnp.tile(b2, W).reshape(1, WCo)

    kernel = functools.partial(_double_conv_kernel, H=H, W=W, Cout=Cout)

    out_rows = pl.pallas_call(
        kernel,
        out_shape=jax.ShapeDtypeStruct((N, H, WCo), x_nchw.dtype),
        grid_spec=pltpu.PrefetchScalarGridSpec(
            num_scalar_prefetch=0,
            grid=(N,),
            in_specs=[
                pl.BlockSpec((1, H + 2, (W + 2) * Cin), lambda n: (n, 0, 0)),
                pl.BlockSpec((3, (W + 2) * Cin, WCo), lambda n: (0, 0, 0)),
                pl.BlockSpec((1, WCo), lambda n: (0, 0)),
                pl.BlockSpec((3, (W + 2) * Cout, WCo), lambda n: (0, 0, 0)),
                pl.BlockSpec((1, WCo), lambda n: (0, 0)),
            ],
            out_specs=pl.BlockSpec((1, H, WCo), lambda n: (n, 0, 0)),
            scratch_shapes=[pltpu.VMEM((H + 2, (W + 2) * Cout), jnp.float32)],
        ),
        compiler_params=pltpu.CompilerParams(
            dimension_semantics=("parallel",)),
    )(x_rows, band1, b1_l, band2, b2_l)

    # (N, H, W*Cout) -> (N, H, W, Cout) (free reshape) -> NCHW (tiny transpose).
    return jnp.transpose(out_rows.reshape(N, H, W, Cout), (0, 3, 1, 2))


def _reference(x_nchw, w1, b1, w2, b2):
    """Pure-JAX reference (lax conv) for correctness checking."""
    def conv(x, w, b):
        y = jax.lax.conv_general_dilated(
            x, w, window_strides=(1, 1), padding=((1, 1), (1, 1)),
            dimension_numbers=("NCHW", "OIHW", "NCHW"))
        return jnp.maximum(y + b[None, :, None, None], 0.0)
    return conv(conv(x_nchw, w1, b1), w2, b2)


if __name__ == "__main__":
    # Small shapes consistent with the module: in_channels=4, out_channels=8.
    N, Cin, Cout, H, W = 2, 4, 8, 16, 16

    key = jax.random.PRNGKey(0)
    kx_, kw1, kb1, kw2, kb2 = jax.random.split(key, 5)

    x = jax.random.normal(kx_, (N, Cin, H, W), dtype=jnp.float32)

    # Deterministic synthetic parameters (Conv2d weight shape: (Cout, Cin, 3, 3)).
    fan_in1 = Cin * 9
    w1 = jax.random.uniform(kw1, (Cout, Cin, 3, 3), jnp.float32,
                            -1.0, 1.0) / jnp.sqrt(fan_in1)
    b1 = jax.random.uniform(kb1, (Cout,), jnp.float32, -1.0, 1.0) / jnp.sqrt(fan_in1)
    fan_in2 = Cout * 9
    w2 = jax.random.uniform(kw2, (Cout, Cout, 3, 3), jnp.float32,
                            -1.0, 1.0) / jnp.sqrt(fan_in2)
    b2 = jax.random.uniform(kb2, (Cout,), jnp.float32, -1.0, 1.0) / jnp.sqrt(fan_in2)

    out = jax.block_until_ready(double_conv_forward(x, w1, b1, w2, b2))

    ref = jax.block_until_ready(_reference(x, w1, b1, w2, b2))
    assert out.shape == (N, Cout, H, W), out.shape
    assert jnp.allclose(out, ref, atol=1e-4, rtol=1e-4), "mismatch vs reference"

    print("KERNEL_OK")
</pallas_src>

<mosaic_0001>
module attributes {stable_mosaic.version = 11 : i64} {
  func.func @_double_conv_kernel(%arg0: i32, %arg1: memref<1x18x72xf32, #tpu.memory_space<vmem>>, %arg2: memref<3x72x128xf32, #tpu.memory_space<vmem>>, %arg3: memref<1x128xf32, #tpu.memory_space<vmem>>, %arg4: memref<3x144x128xf32, #tpu.memory_space<vmem>>, %arg5: memref<1x128xf32, #tpu.memory_space<vmem>>, %arg6: memref<1x16x128xf32, #tpu.memory_space<vmem>>, %arg7: memref<18x144xf32, #tpu.memory_space<vmem>>) attributes {dimension_semantics = [#tpu.dimension_semantics<parallel>], iteration_bounds = array<i64: 2>, scalar_prefetch = 0 : i64, scratch_operands = 1 : i64, tpu.core_type = #tpu.core_type<tc>, window_params = [{transform_indices = @transform_0, window_bounds = array<i64: 1, 18, 72>}, {pipeline_mode = #tpu.pipeline_mode<synchronous>, transform_indices = @transform_1, window_bounds = array<i64: 3, 72, 128>}, {pipeline_mode = #tpu.pipeline_mode<synchronous>, transform_indices = @transform_2, window_bounds = array<i64: 1, 128>}, {pipeline_mode = #tpu.pipeline_mode<synchronous>, transform_indices = @transform_3, window_bounds = array<i64: 3, 144, 128>}, {pipeline_mode = #tpu.pipeline_mode<synchronous>, transform_indices = @transform_4, window_bounds = array<i64: 1, 128>}, {transform_indices = @transform_5, window_bounds = array<i64: 1, 16, 128>}]} {
    %cst = arith.constant 0.000000e+00 : f32
    %0 = vector.broadcast %cst : f32 to vector<16x128xf32>
    %c0 = arith.constant 0 : index
    %c0_0 = arith.constant 0 : index
    %c0_1 = arith.constant 0 : index
    %1 = vector.load %arg1[%c0, %c0_0, %c0_1] : memref<1x18x72xf32, #tpu.memory_space<vmem>>, vector<1x16x72xf32>
    %2 = vector.shape_cast %1 : vector<1x16x72xf32> to vector<16x72xf32>
    %c0_2 = arith.constant 0 : index
    %c0_3 = arith.constant 0 : index
    %c0_4 = arith.constant 0 : index
    %3 = vector.load %arg2[%c0_2, %c0_3, %c0_4] : memref<3x72x128xf32, #tpu.memory_space<vmem>>, vector<1x72x128xf32>
    %4 = vector.shape_cast %3 : vector<1x72x128xf32> to vector<72x128xf32>
    %cst_5 = arith.constant dense<0.000000e+00> : vector<16x128xf32>
    %5 = tpu.matmul %2, %4, %cst_5 {dimension_numbers = #tpu.dot_dimension_numbers<[1], [0], [0], [1], [0, 0, 1, 1], [], []>} : vector<16x72xf32>, vector<72x128xf32>, vector<16x128xf32> -> vector<16x128xf32>
    %6 = arith.addf %0, %5 : vector<16x128xf32>
    %c0_6 = arith.constant 0 : index
    %c1 = arith.constant 1 : index
    %c0_7 = arith.constant 0 : index
    %7 = vector.load %arg1[%c0_6, %c1, %c0_7] : memref<1x18x72xf32, #tpu.memory_space<vmem>>, vector<1x16x72xf32>
    %8 = vector.shape_cast %7 : vector<1x16x72xf32> to vector<16x72xf32>
    %c1_8 = arith.constant 1 : index
    %c0_9 = arith.constant 0 : index
    %c0_10 = arith.constant 0 : index
    %9 = vector.load %arg2[%c1_8, %c0_9, %c0_10] : memref<3x72x128xf32, #tpu.memory_space<vmem>>, vector<1x72x128xf32>
    %10 = vector.shape_cast %9 : vector<1x72x128xf32> to vector<72x128xf32>
    %cst_11 = arith.constant dense<0.000000e+00> : vector<16x128xf32>
    %11 = tpu.matmul %8, %10, %cst_11 {dimension_numbers = #tpu.dot_dimension_numbers<[1], [0], [0], [1], [0, 0, 1, 1], [], []>} : vector<16x72xf32>, vector<72x128xf32>, vector<16x128xf32> -> vector<16x128xf32>
    %12 = arith.addf %6, %11 : vector<16x128xf32>
    %c0_12 = arith.constant 0 : index
    %c2 = arith.constant 2 : index
    %c0_13 = arith.constant 0 : index
    %13 = vector.load %arg1[%c0_12, %c2, %c0_13] : memref<1x18x72xf32, #tpu.memory_space<vmem>>, vector<1x16x72xf32>
    %14 = vector.shape_cast %13 : vector<1x16x72xf32> to vector<16x72xf32>
    %c2_14 = arith.constant 2 : index
    %c0_15 = arith.constant 0 : index
    %c0_16 = arith.constant 0 : index
    %15 = vector.load %arg2[%c2_14, %c0_15, %c0_16] : memref<3x72x128xf32, #tpu.memory_space<vmem>>, vector<1x72x128xf32>
    %16 = vector.shape_cast %15 : vector<1x72x128xf32> to vector<72x128xf32>
    %cst_17 = arith.constant dense<0.000000e+00> : vector<16x128xf32>
    %17 = tpu.matmul %14, %16, %cst_17 {dimension_numbers = #tpu.dot_dimension_numbers<[1], [0], [0], [1], [0, 0, 1, 1], [], []>} : vector<16x72xf32>, vector<72x128xf32>, vector<16x128xf32> -> vector<16x128xf32>
    %18 = arith.addf %12, %17 : vector<16x128xf32>
    %c0_18 = arith.constant 0 : index
    %c0_19 = arith.constant 0 : index
    %19 = vector.load %arg3[%c0_18, %c0_19] : memref<1x128xf32, #tpu.memory_space<vmem>>, vector<1x128xf32>
    %20 = vector.broadcast %19 : vector<1x128xf32> to vector<16x128xf32>
    %21 = arith.addf %18, %20 : vector<16x128xf32>
    %cst_20 = arith.constant 0.000000e+00 : f32
    %22 = vector.broadcast %cst_20 : f32 to vector<16x128xf32>
    %23 = arith.maximumf %21, %22 : vector<16x128xf32>
    %cst_21 = arith.constant 0.000000e+00 : f32
    %24 = vector.broadcast %cst_21 : f32 to vector<18x144xf32>
    %c0_22 = arith.constant 0 : index
    %c0_23 = arith.constant 0 : index
    %25 = vector.load %arg7[%c0_22, %c0_23] : memref<18x144xf32, #tpu.memory_space<vmem>>, vector<18x144xf32>
    tpu.vector_store %arg7[%c0_22, %c0_23], %24 {strides = array<i32>} : memref<18x144xf32, #tpu.memory_space<vmem>>, vector<18x144xf32>,
    %c1_24 = arith.constant 1 : index
    %c0_25 = arith.constant 0 : index
    %26 = vector.load %arg7[%c1_24, %c0_25] : memref<18x144xf32, #tpu.memory_space<vmem>>, vector<16x128xf32>
    tpu.vector_store %arg7[%c1_24, %c0_25], %23 {strides = array<i32>} : memref<18x144xf32, #tpu.memory_space<vmem>>, vector<16x128xf32>,
    %cst_26 = arith.constant 0.000000e+00 : f32
    %27 = vector.broadcast %cst_26 : f32 to vector<16x128xf32>
    %c0_27 = arith.constant 0 : index
    %c0_28 = arith.constant 0 : index
    %28 = vector.load %arg7[%c0_27, %c0_28] : memref<18x144xf32, #tpu.memory_space<vmem>>, vector<16x144xf32>
    %c0_29 = arith.constant 0 : index
    %c0_30 = arith.constant 0 : index
    %c0_31 = arith.constant 0 : index
    %29 = vector.load %arg4[%c0_29, %c0_30, %c0_31] : memref<3x144x128xf32, #tpu.memory_space<vmem>>, vector<1x144x128xf32>
    %30 = vector.shape_cast %29 : vector<1x144x128xf32> to vector<144x128xf32>
    %cst_32 = arith.constant dense<0.000000e+00> : vector<16x128xf32>
    %31 = tpu.matmul %28, %30, %cst_32 {dimension_numbers = #tpu.dot_dimension_numbers<[1], [0], [0], [1], [0, 0, 1, 1], [], []>} : vector<16x144xf32>, vector<144x128xf32>, vector<16x128xf32> -> vector<16x128xf32>
    %32 = arith.addf %27, %31 : vector<16x128xf32>
    %c1_33 = arith.constant 1 : index
    %c0_34 = arith.constant 0 : index
    %33 = vector.load %arg7[%c1_33, %c0_34] : memref<18x144xf32, #tpu.memory_space<vmem>>, vector<16x144xf32>
    %c1_35 = arith.constant 1 : index
    %c0_36 = arith.constant 0 : index
    %c0_37 = arith.constant 0 : index
    %34 = vector.load %arg4[%c1_35, %c0_36, %c0_37] : memref<3x144x128xf32, #tpu.memory_space<vmem>>, vector<1x144x128xf32>
    %35 = vector.shape_cast %34 : vector<1x144x128xf32> to vector<144x128xf32>
    %cst_38 = arith.constant dense<0.000000e+00> : vector<16x128xf32>
    %36 = tpu.matmul %33, %35, %cst_38 {dimension_numbers = #tpu.dot_dimension_numbers<[1], [0], [0], [1], [0, 0, 1, 1], [], []>} : vector<16x144xf32>, vector<144x128xf32>, vector<16x128xf32> -> vector<16x128xf32>
    %37 = arith.addf %32, %36 : vector<16x128xf32>
    %c2_39 = arith.constant 2 : index
    %c0_40 = arith.constant 0 : index
    %38 = vector.load %arg7[%c2_39, %c0_40] : memref<18x144xf32, #tpu.memory_space<vmem>>, vector<16x144xf32>
    %c2_41 = arith.constant 2 : index
    %c0_42 = arith.constant 0 : index
    %c0_43 = arith.constant 0 : index
    %39 = vector.load %arg4[%c2_41, %c0_42, %c0_43] : memref<3x144x128xf32, #tpu.memory_space<vmem>>, vector<1x144x128xf32>
    %40 = vector.shape_cast %39 : vector<1x144x128xf32> to vector<144x128xf32>
    %cst_44 = arith.constant dense<0.000000e+00> : vector<16x128xf32>
    %41 = tpu.matmul %38, %40, %cst_44 {dimension_numbers = #tpu.dot_dimension_numbers<[1], [0], [0], [1], [0, 0, 1, 1], [], []>} : vector<16x144xf32>, vector<144x128xf32>, vector<16x128xf32> -> vector<16x128xf32>
    %42 = arith.addf %37, %41 : vector<16x128xf32>
    %c0_45 = arith.constant 0 : index
    %c0_46 = arith.constant 0 : index
    %43 = vector.load %arg5[%c0_45, %c0_46] : memref<1x128xf32, #tpu.memory_space<vmem>>, vector<1x128xf32>
    %44 = vector.broadcast %43 : vector<1x128xf32> to vector<16x128xf32>
    %45 = arith.addf %42, %44 : vector<16x128xf32>
    %cst_47 = arith.constant 0.000000e+00 : f32
    %46 = vector.broadcast %cst_47 : f32 to vector<16x128xf32>
    %47 = arith.maximumf %45, %46 : vector<16x128xf32>
    %c0_48 = arith.constant 0 : index
    %c0_49 = arith.constant 0 : index
    %c0_50 = arith.constant 0 : index
    %48 = vector.load %arg6[%c0_48, %c0_49, %c0_50] : memref<1x16x128xf32, #tpu.memory_space<vmem>>, vector<1x16x128xf32>
    %49 = vector.shape_cast %48 : vector<1x16x128xf32> to vector<16x128xf32>
    %50 = vector.shape_cast %47 : vector<16x128xf32> to vector<1x16x128xf32>
    tpu.vector_store %arg6[%c0_48, %c0_49, %c0_50], %50 {strides = array<i32>} : memref<1x16x128xf32, #tpu.memory_space<vmem>>, vector<1x16x128xf32>,
    return
  }
  func.func @transform_0(%arg0: i32) -> (i32, i32, i32) {
    %c0_i32 = arith.constant 0 : i32
    %c0_i32_0 = arith.constant 0 : i32
    %c0_i32_1 = arith.constant 0 : i32
    return %arg0, %c0_i32, %c0_i32_0 : i32, i32, i32
  }
  func.func @transform_1(%arg0: i32) -> (i32, i32, i32) {
    %c0_i32 = arith.constant 0 : i32
    %c0_i32_0 = arith.constant 0 : i32
    %c0_i32_1 = arith.constant 0 : i32
    %c0_i32_2 = arith.constant 0 : i32
    return %c0_i32, %c0_i32_0, %c0_i32_1 : i32, i32, i32
  }
  func.func @transform_2(%arg0: i32) -> (i32, i32) {
    %c0_i32 = arith.constant 0 : i32
    %c0_i32_0 = arith.constant 0 : i32
    %c0_i32_1 = arith.constant 0 : i32
    return %c0_i32, %c0_i32_0 : i32, i32
  }
  func.func @transform_3(%arg0: i32) -> (i32, i32, i32) {
    %c0_i32 = arith.constant 0 : i32
    %c0_i32_0 = arith.constant 0 : i32
    %c0_i32_1 = arith.constant 0 : i32
    %c0_i32_2 = arith.constant 0 : i32
    return %c0_i32, %c0_i32_0, %c0_i32_1 : i32, i32, i32
  }
  func.func @transform_4(%arg0: i32) -> (i32, i32) {
    %c0_i32 = arith.constant 0 : i32
    %c0_i32_0 = arith.constant 0 : i32
    %c0_i32_1 = arith.constant 0 : i32
    return %c0_i32, %c0_i32_0 : i32, i32
  }
  func.func @transform_5(%arg0: i32) -> (i32, i32, i32) {
    %c0_i32 = arith.constant 0 : i32
    %c0_i32_0 = arith.constant 0 : i32
    %c0_i32_1 = arith.constant 0 : i32
    return %arg0, %c0_i32, %c0_i32_0 : i32, i32, i32
  }
}

</mosaic_0001>

<llo_original>
// kernel: tile.13
$region0: #{tile.13}
  #allocation0 [shape = 's32[1]{0}', space=sflag, size = 0x4, scoped, tag = 'scoped memory for tile.13']
  %s0 = inlined_call_operand.vmem [shape: f32[8], index: 0, kind: input, shape index: {}]
  %s1 = inlined_call_operand.vmem [shape: f32[16,8], index: 1, kind: output, shape index: {}]
  // Predicated region
  $region2: #{tile.13} parent=0 // pred_check
    _
  $region3: #{tile.13} parent=0 // pred_check_branch
    %3 = sbr.rel (0) target = $region5
  $region4: #{tile.13} parent=0 // pred_region
    _
  $region5: #{tile.13} parent=0 // pred_fallthru
    _
  %v4 = vld [vmem:[%s0] ss:$0 sm:$0xff]
  %5 = vst [vmem:[%s1] sm:$0xff] %v4
  %s6 = scalar_lea.vmem %s1, 8
  %7 = vst [vmem:[%s6] sm:$0xff] %v4

// kernel: tile.14
$region0: #{tile.14}
  %s0 = inlined_call_operand.vmem [shape: f32[16,8], index: 0, kind: input, shape index: {}]
  %s1 = inlined_call_operand.vmem [shape: f32[1,128], index: 1, kind: output, shape index: {}]
  $region1: #{tile.14} parent=0
    #allocation0 [shape = 'u8[4096]{0}', space=vmem, size = 0x1000, scoped, tag = 'scoped mem for output reshape']
    %v2 = vld [vmem:[%s0] sm:$0x1]
    %vm3 = vcmask 64512
    %4 = vst.msk [vmem:[#allocation0] sm:$0x1] %vm3, %v2
    %s5 = scalar_lea.vmem %s0, 15
    %v6 = vld [vmem:[%s5] sm:$0x1]
    %7 = vrot.lane.b32.xlu0 %v6, 120
    %v8 = vpop.permute.xlu0 %7
    %vm9 = vcmask 1048512
    %10 = vst.msk [vmem:[#allocation0] sm:$0x1] %vm9, %v8
    %s11 = scalar_lea.vmem %s0, 14
    %v12 = vld [vmem:[%s11] sm:$0x1]
    %13 = vrot.lane.b32.xlu0 %v12, 112
    %v14 = vpop.permute.xlu0 %13
    %vm15 = vcmask 982912
    %16 = vst.msk [vmem:[#allocation0] sm:$0x1] %vm15, %v14
    %s17 = scalar_lea.vmem %s0, 13
    %v18 = vld [vmem:[%s17] sm:$0x1]
    %19 = vrot.lane.b32.xlu0 %v18, 104
    %v20 = vpop.permute.xlu0 %19
    %vm21 = vcmask 917312
    %22 = vst.msk [vmem:[#allocation0] sm:$0x1] %vm21, %v20
    %s23 = scalar_lea.vmem %s0, 12
    %v24 = vld [vmem:[%s23] sm:$0x1]
    %25 = vrot.lane.b32.xlu0 %v24, 96
    %v26 = vpop.permute.xlu0 %25
    %vm27 = vcmask 851712
    %28 = vst.msk [vmem:[#allocation0] sm:$0x1] %vm27, %v26
    %s29 = scalar_lea.vmem %s0, 11
    %v30 = vld [vmem:[%s29] sm:$0x1]
    %31 = vrot.lane.b32.xlu0 %v30, 88
    %v32 = vpop.permute.xlu0 %31
    %vm33 = vcmask 786112
    %34 = vst.msk [vmem:[#allocation0] sm:$0x1] %vm33, %v32
    %s35 = scalar_lea.vmem %s0, 10
    %v36 = vld [vmem:[%s35] sm:$0x1]
    %37 = vrot.lane.b32.xlu0 %v36, 80
    %v38 = vpop.permute.xlu0 %37
    %vm39 = vcmask 720512
    %40 = vst.msk [vmem:[#allocation0] sm:$0x1] %vm39, %v38
    %s41 = scalar_lea.vmem %s0, 9
    %v42 = vld [vmem:[%s41] sm:$0x1]
    %43 = vrot.lane.b32.xlu0 %v42, 72
    %v44 = vpop.permute.xlu0 %43
    %vm45 = vcmask 654912
    %46 = vst.msk [vmem:[#allocation0] sm:$0x1] %vm45, %v44
    %s47 = scalar_lea.vmem %s0, 8
    %v48 = vld [vmem:[%s47] sm:$0x1]
    %49 = vrot.lane.b32.xlu0 %v48, 64
    %v50 = vpop.permute.xlu0 %49
    %vm51 = vcmask 589312
    %52 = vst.msk [vmem:[#allocation0] sm:$0x1] %vm51, %v50
    %s53 = scalar_lea.vmem %s0, 7
    %v54 = vld [vmem:[%s53] sm:$0x1]
    %55 = vrot.lane.b32.xlu0 %v54, 56
    %v56 = vpop.permute.xlu0 %55
    %vm57 = vcmask 523712
    %58 = vst.msk [vmem:[#allocation0] sm:$0x1] %vm57, %v56
    %s59 = scalar_lea.vmem %s0, 6
    %v60 = vld [vmem:[%s59] sm:$0x1]
    %61 = vrot.lane.b32.xlu0 %v60, 48
    %v62 = vpop.permute.xlu0 %61
    %vm63 = vcmask 458112
    %64 = vst.msk [vmem:[#allocation0] sm:$0x1] %vm63, %v62
    %s65 = scalar_lea.vmem %s0, 5
    %v66 = vld [vmem:[%s65] sm:$0x1]
    %67 = vrot.lane.b32.xlu0 %v66, 40
    %v68 = vpop.permute.xlu0 %67
    %vm69 = vcmask 392512
    %70 = vst.msk [vmem:[#allocation0] sm:$0x1] %vm69, %v68
    %s71 = scalar_lea.vmem %s0, 4
    %v72 = vld [vmem:[%s71] sm:$0x1]
    %73 = vrot.lane.b32.xlu0 %v72, 32
    %v74 = vpop.permute.xlu0 %73
    %vm75 = vcmask 326912
    %76 = vst.msk [vmem:[#allocation0] sm:$0x1] %vm75, %v74
    %s77 = scalar_lea.vmem %s0, 3
    %v78 = vld [vmem:[%s77] sm:$0x1]
    %79 = vrot.lane.b32.xlu0 %v78, 24
    %v80 = vpop.permute.xlu0 %79
    %vm81 = vcmask 261312
    %82 = vst.msk [vmem:[#allocation0] sm:$0x1] %vm81, %v80
    %s83 = scalar_lea.vmem %s0, 2
    %v84 = vld [vmem:[%s83] sm:$0x1]
    %85 = vrot.lane.b32.xlu0 %v84, 16
    %v86 = vpop.permute.xlu0 %85
    %vm87 = vcmask 195712
    %88 = vst.msk [vmem:[#allocation0] sm:$0x1] %vm87, %v86
    %s89 = scalar_lea.vmem %s0, 1
    %v90 = vld [vmem:[%s89] sm:$0x1]
    %91 = vrot.lane.b32.xlu0 %v90, 8
    %v92 = vpop.permute.xlu0 %91
    %vm93 = vcmask 130112
    %94 = vst.msk [vmem:[#allocation0] sm:$0x1] %vm93, %v92
    %s96 = ssub.s32 2, 1
    %v97 = vld [vmem:[#allocation0] sm:%s96]
    %s99 = ssub.s32 2, 1
    %100 = vst [vmem:[%s1] sm:%s99] %v97

// kernel: double_conv_forward.1
$region0: #{double_conv_forward.1}
  #allocation0 [shape = 'u32[]', space=smem, size = 0x4, offset = 0x4, fixed_abs, tag = 'smem constant byte address 0x4 - core index']
  #allocation1 [shape = 'u32[72,128]{1,0:T(1,128)}', space=vmem, size = 0x9000, scoped, tag = 'internal scratch']
  #allocation2 [shape = 'f32[18,144]{1,0:T(8,128)}', space=vmem, size = 0x6000, scoped, tag = 'scratch operand']
  %s0 = inlined_call_operand.vmem [shape: f32[2,18,72], index: 0, kind: input, shape index: {}]
  %s1 = inlined_call_operand.vmem [shape: f32[3,72,128], index: 1, kind: input, shape index: {}]
  %s2 = inlined_call_operand.vmem [shape: f32[1,128], index: 2, kind: input, shape index: {}]
  %s3 = inlined_call_operand.vmem [shape: f32[3,144,128], index: 3, kind: input, shape index: {}]
  %s4 = inlined_call_operand.vmem [shape: f32[1,128], index: 4, kind: input, shape index: {}]
  %s5 = inlined_call_operand.vmem [shape: f32[2,16,128], index: 5, kind: output, shape index: {}]
  %s6 = sld [smem:[#allocation0]]
  $region53: #{double_conv_forward.1} parent=0
    _
  %s8 = ssub.s32 1, %s6
  %s9 = scalar_select 0, %s8, %s6
  loop: start=0, step=1, limit=4
  $region2: #{double_conv_forward.1} parent=0 // loop_pre_header
    _
  $region3: #{double_conv_forward.1} parent=0 // loop_header
    %s11 = sphi 0, %s15
    %p12 = scmp.ge.s32.totalorder %s11, 4
    %s21 = sphi 0, %s23
    %s24 = sphi 0, %s21
    %s25 = sphi 0, %s24
    %s41 = sphi 0, %s25
    %s45 = sphi 0, %s45
    %s47 = sphi 0, %s45
    %s48 = sphi 0, %s47
    %s62 = sphi 0, %s48
    %s66 = sphi 0, %s66
    %s68 = sphi 0, %s66
    %s69 = sphi 0, %s68
    %s83 = sphi 0, %s69
    %s87 = sphi 0, %s87
    %s89 = sphi 0, %s87
    %s90 = sphi 0, %s89
    %s104 = sphi 0, %s90
    %s108 = sphi 0, %s108
    %s110 = sphi 0, %s108
    %s111 = sphi 0, %s110
    %s125 = sphi 0, %s111
    %s131 = sphi 0, %s133
    %s134 = sphi 0, %s131
    %s135 = sphi 0, %s134
    %s151 = sphi 0, %s135
  $region4: #{double_conv_forward.1} parent=0 // loop_header_branch
    %14 = sbr.rel (%p12) target = $region8
  $region5: #{double_conv_forward.1} parent=0 // loop_body
    %s16 = ssub.s32 %s11, 1
    %s17 = ssub.s32 %s11, 2
    %s18 = sadd.s32 %s11, 1
    %s19 = ssub.s32 %s11, %s18
    %p20 = scmp.eq.s32.totalorder %s19, 0
    %s22 = sadd.s32 %s21, 1
    %s23 = scalar_select %p20, %s21, %s22
    %p26 = pneg %p20
    %p27 = scmp.eq.s32.totalorder %s11, 1
    %p28 = por %p26, %p27
    %p29 = scmp.ne.s32.totalorder %s21, %s24
    %p30 = scmp.eq.s32.totalorder %s11, 0
    %p31 = por %p29, %p30
    %p32 = scmp.ne.s32.totalorder %s21, %s24
    %p33 = scmp.eq.s32.totalorder %s16, 1
    %p34 = por %p32, %p33
    %p35 = scmp.ne.s32.totalorder %s24, %s25
    %p36 = scmp.eq.s32.totalorder %s16, 0
    %p37 = por %p35, %p36
    %p38 = scmp.ne.s32.totalorder %s24, %s25
    %p39 = scmp.eq.s32.totalorder %s17, 1
    %p40 = por %p38, %p39
    %p42 = scmp.ne.s32.totalorder %s25, %s41
    %p43 = scmp.eq.s32.totalorder %s17, 0
    %p44 = por %p42, %p43
    %s46 = sadd.s32 %s45, 1
    %p49 = scmp.eq.s32.totalorder %s11, 1
    %p50 = scmp.ne.s32.totalorder %s45, %s47
    %p51 = scmp.eq.s32.totalorder %s11, 0
    %p52 = por %p50, %p51
    %p53 = scmp.ne.s32.totalorder %s45, %s47
    %p54 = scmp.eq.s32.totalorder %s16, 1
    %p55 = por %p53, %p54
    %p56 = scmp.ne.s32.totalorder %s47, %s48
    %p57 = scmp.eq.s32.totalorder %s16, 0
    %p58 = por %p56, %p57
    %p59 = scmp.ne.s32.totalorder %s47, %s48
    %p60 = scmp.eq.s32.totalorder %s17, 1
    %p61 = por %p59, %p60
    %p63 = scmp.ne.s32.totalorder %s48, %s62
    %p64 = scmp.eq.s32.totalorder %s17, 0
    %p65 = por %p63, %p64
    %s67 = sadd.s32 %s66, 1
    %p70 = scmp.eq.s32.totalorder %s11, 1
    %p71 = scmp.ne.s32.totalorder %s66, %s68
    %p72 = scmp.eq.s32.totalorder %s11, 0
    %p73 = por %p71, %p72
    %p74 = scmp.ne.s32.totalorder %s66, %s68
    %p75 = scmp.eq.s32.totalorder %s16, 1
    %p76 = por %p74, %p75
    %p77 = scmp.ne.s32.totalorder %s68, %s69
    %p78 = scmp.eq.s32.totalorder %s16, 0
    %p79 = por %p77, %p78
    %p80 = scmp.ne.s32.totalorder %s68, %s69
    %p81 = scmp.eq.s32.totalorder %s17, 1
    %p82 = por %p80, %p81
    %p84 = scmp.ne.s32.totalorder %s69, %s83
    %p85 = scmp.eq.s32.totalorder %s17, 0
    %p86 = por %p84, %p85
    %s88 = sadd.s32 %s87, 1
    %p91 = scmp.eq.s32.totalorder %s11, 1
    %p92 = scmp.ne.s32.totalorder %s87, %s89
    %p93 = scmp.eq.s32.totalorder %s11, 0
    %p94 = por %p92, %p93
    %p95 = scmp.ne.s32.totalorder %s87, %s89
    %p96 = scmp.eq.s32.totalorder %s16, 1
    %p97 = por %p95, %p96
    %p98 = scmp.ne.s32.totalorder %s89, %s90
    %p99 = scmp.eq.s32.totalorder %s16, 0
    %p100 = por %p98, %p99
    %p101 = scmp.ne.s32.totalorder %s89, %s90
    %p102 = scmp.eq.s32.totalorder %s17, 1
    %p103 = por %p101, %p102
    %p105 = scmp.ne.s32.totalorder %s90, %s104
    %p106 = scmp.eq.s32.totalorder %s17, 0
    %p107 = por %p105, %p106
    %s109 = sadd.s32 %s108, 1
    %p112 = scmp.eq.s32.totalorder %s11, 1
    %p113 = scmp.ne.s32.totalorder %s108, %s110
    %p114 = scmp.eq.s32.totalorder %s11, 0
    %p115 = por %p113, %p114
    %p116 = scmp.ne.s32.totalorder %s108, %s110
    %p117 = scmp.eq.s32.totalorder %s16, 1
    %p118 = por %p116, %p117
    %p119 = scmp.ne.s32.totalorder %s110, %s111
    %p120 = scmp.eq.s32.totalorder %s16, 0
    %p121 = por %p119, %p120
    %p122 = scmp.ne.s32.totalorder %s110, %s111
    %p123 = scmp.eq.s32.totalorder %s17, 1
    %p124 = por %p122, %p123
    %p126 = scmp.ne.s32.totalorder %s111, %s125
    %p127 = scmp.eq.s32.totalorder %s17, 0
    %p128 = por %p126, %p127
    %s129 = ssub.s32 %s11, %s18
    %p130 = scmp.eq.s32.totalorder %s129, 0
    %s132 = sadd.s32 %s131, 1
    %s133 = scalar_select %p130, %s131, %s132
    %p136 = pneg %p130
    %p137 = scmp.eq.s32.totalorder %s11, 1
    %p138 = por %p136, %p137
    %p139 = scmp.ne.s32.totalorder %s131, %s134
    %p140 = scmp.eq.s32.totalorder %s11, 0
    %p141 = por %p139, %p140
    %p142 = scmp.ne.s32.totalorder %s131, %s134
    %p143 = scmp.eq.s32.totalorder %s16, 1
    %p144 = por %p142, %p143
    %p145 = scmp.ne.s32.totalorder %s134, %s135
    %p146 = scmp.eq.s32.totalorder %s16, 0
    %p147 = por %p145, %p146
    %p148 = scmp.ne.s32.totalorder %s134, %s135
    %p149 = scmp.eq.s32.totalorder %s17, 1
    %p150 = por %p148, %p149
    %p152 = scmp.ne.s32.totalorder %s135, %s151
    %p153 = scmp.eq.s32.totalorder %s17, 0
    %p154 = por %p152, %p153
    %p155 = scmp.le.s32.totalorder 1, %s11
    %p156 = scmp.lt.s32.totalorder %s11, 3
    %p157 = pnand %p155, %p156
    %p158 = pneg %p157
    // Predicated region
    $region9: #{double_conv_forward.1} parent=5 // pred_check
      _
    $region10: #{double_conv_forward.1} parent=5 // pred_check_branch
      %160 = sbr.rel (%p157) target = $region12
    $region11: #{double_conv_forward.1} parent=5 // pred_region
      %s161 = ssub.s32 %s11, 1
      // Predicated region
      $region13: #{double_conv_forward.1} parent=11 // pred_check
        %p162 = pneg %p58
      $region14: #{double_conv_forward.1} parent=11 // pred_check_branch
        %164 = sbr.rel (%p162) target = $region16
      $region15: #{double_conv_forward.1} parent=11 // pred_region
        _
      $region16: #{double_conv_forward.1} parent=11 // pred_fallthru
        _
      // Predicated region
      $region17: #{double_conv_forward.1} parent=11 // pred_check
        %p165 = pneg %p79
      $region18: #{double_conv_forward.1} parent=11 // pred_check_branch
        %167 = sbr.rel (%p165) target = $region20
      $region19: #{double_conv_forward.1} parent=11 // pred_region
        _
      $region20: #{double_conv_forward.1} parent=11 // pred_fallthru
        _
      // Predicated region
      $region21: #{double_conv_forward.1} parent=11 // pred_check
        %p168 = pneg %p100
      $region22: #{double_conv_forward.1} parent=11 // pred_check_branch
        %170 = sbr.rel (%p168) target = $region24
      $region23: #{double_conv_forward.1} parent=11 // pred_region
        _
      $region24: #{double_conv_forward.1} parent=11 // pred_fallthru
        _
      // Predicated region
      $region25: #{double_conv_forward.1} parent=11 // pred_check
        %p171 = pneg %p121
      $region26: #{double_conv_forward.1} parent=11 // pred_check_branch
        %173 = sbr.rel (%p171) target = $region28
      $region27: #{double_conv_forward.1} parent=11 // pred_region
        _
      $region28: #{double_conv_forward.1} parent=11 // pred_fallthru
        _
    $region12: #{double_conv_forward.1} parent=5 // pred_fallthru
      _
    %p174 = scmp.lt.s32.totalorder %s11, 2
    // Predicated region
    $region29: #{double_conv_forward.1} parent=5 // pred_check
      %p175 = pneg %p174
    $region30: #{double_conv_forward.1} parent=5 // pred_check_branch
      %177 = sbr.rel (%p175) target = $region32
    $region31: #{double_conv_forward.1} parent=5 // pred_region
      // Predicated region
      $region33: #{double_conv_forward.1} parent=31 // pred_check
        %p178 = pneg %p31
      $region34: #{double_conv_forward.1} parent=31 // pred_check_branch
        %180 = sbr.rel (%p178) target = $region36
      $region35: #{double_conv_forward.1} parent=31 // pred_region
        %p181 = scmp.lt.s32.totalorder %s11, 1
        %s182 = scalar_select %p181, %s11, 1
        %s183 = smul.addr %s182, 3
        %s184 = smul.addr %s183, 8
        %s185 = scalar_lea.vmem %s0, %s184
      $region36: #{double_conv_forward.1} parent=31 // pred_fallthru
        _
    $region32: #{double_conv_forward.1} parent=5 // pred_fallthru
      _
    %p186 = scmp.le.s32.totalorder 1, %s11
    %p187 = scmp.lt.s32.totalorder %s11, 3
    %p188 = pnand %p186, %p187
    %p189 = pneg %p188
    // Predicated region
    $region37: #{double_conv_forward.1} parent=5 // pred_check
      _
    $region38: #{double_conv_forward.1} parent=5 // pred_check_branch
      %191 = sbr.rel (%p188) target = $region40
    $region39: #{double_conv_forward.1} parent=5 // pred_region
      %s192 = ssub.s32 %s11, 1
      %p193 = scmp.lt.s32.totalorder %s16, 1
      %s194 = scalar_select %p193, %s16, 1
      %s195 = smul.addr %s194, 3
      %s196 = smul.addr %s195, 8
      %s197 = scalar_lea.vmem %s0, %s196
      %p198 = pneg %p37
      %p199 = pneg %p34
      %p200 = pneg %p58
      %p201 = pneg %p55
      %p202 = pneg %p79
      %p203 = pneg %p76
      %p204 = pneg %p100
      %p205 = pneg %p97
      %p206 = pneg %p121
      %p207 = pneg %p118
      %p208 = pneg %p147
      %p209 = pneg %p144
      %p210 = scmp.lt.s32.totalorder %s16, 1
      %s211 = scalar_select %p210, %s16, 1
      %s212 = smul.addr %s211, 2
      %s213 = smul.addr %s212, 8
      %s214 = scalar_lea.vmem %s5, %s213
      %p215 = scmp.lt.s32.totalorder %s16, 1
      %s216 = scalar_select %p215, %s16, 1
      %s217 = smul.addr %s216, 3
      %s218 = smul.addr %s217, 8
      %s219 = scalar_lea.vmem %s0, %s218
      %p220 = scmp.lt.s32.totalorder %s16, 1
      %s221 = scalar_select %p220, %s16, 1
      %s222 = smul.addr %s221, 2
      %s223 = smul.addr %s222, 8
      %s224 = scalar_lea.vmem %s5, %s223
      %v225 = vld [vmem:[%s219] sm:$0xff]
      %v226 = vld [vmem:[%s219 + $0x8] sm:$0xff]
      %v227 = vld [vmem:[%s1] sm:$0xff]
      %v228 = vld [vmem:[%s1 + $0x8] sm:$0xff]
      %v229 = vld [vmem:[%s1 + $0x10] sm:$0xff]
      %v230 = vld [vmem:[%s1 + $0x18] sm:$0xff]
      %v231 = vld [vmem:[%s1 + $0x20] sm:$0xff]
      %v232 = vld [vmem:[%s1 + $0x28] sm:$0xff]
      %v233 = vld [vmem:[%s1 + $0x30] sm:$0xff]
      %v234 = vld [vmem:[%s1 + $0x38] sm:$0xff]
      %v235 = vld [vmem:[%s1 + $0x40] sm:$0xff]
      %v236 = vld [vmem:[%s219 + $0x1] sm:$0xff]
      %v237 = vld [vmem:[%s219 + $0x9] sm:$0xff]
      %s238 = scalar_lea.vmem %s1, 72
      %v239 = vld [vmem:[%s238] sm:$0xff]
      %v240 = vld [vmem:[%s238 + $0x8] sm:$0xff]
      %v241 = vld [vmem:[%s238 + $0x10] sm:$0xff]
      %v242 = vld [vmem:[%s238 + $0x18] sm:$0xff]
      %v243 = vld [vmem:[%s238 + $0x20] sm:$0xff]
      %v244 = vld [vmem:[%s238 + $0x28] sm:$0xff]
      %v245 = vld [vmem:[%s238 + $0x30] sm:$0xff]
      %v246 = vld [vmem:[%s238 + $0x38] sm:$0xff]
      %v247 = vld [vmem:[%s238 + $0x40] sm:$0xff]
      %vm248 = vcmask 588800
      %v250 = vsel %vm248, %v236, 0
      %v253 = vsel %vm248, %v237, 0
      %255 = vmatpush.msra.mxu0 0.0
      %256 = vmatpush.msra.mxu0 0.0
      %257 = vmatpush.msra.mxu0 0.0
      %258 = vmatpush.msra.mxu0 0.0
      %259 = vmatpush.msra.mxu0 0.0
      %260 = vmatpush.msra.mxu0 0.0
      %261 = vmatpush.msra.mxu0 0.0
      %262 = vmatpush.msra.mxu0 %v247
      %263 = vmatpush.msra.mxu0 %v246
      %264 = vmatpush.msra.mxu0 %v245
      %265 = vmatpush.msra.mxu0 %v244
      %266 = vmatpush.msra.mxu0 %v243
      %267 = vmatpush.msra.mxu0 %v242
      %268 = vmatpush.msra.mxu0 %v241
      %269 = vmatpush.msra.mxu0 %v240
      %270 = vmatpush.msra.mxu0 %v239
      %271 = vmatmul.f32.gmra.mxu0 %v250
      %v272 = vpop.f32.mrf.mxu0
      %v273 = vadd.f32 0.0, %v272
      %274 = vmatmul.f32.gmra.mxu0 %v253
      %v275 = vpop.f32.mrf.mxu0
      %v276 = vadd.f32 0.0, %v275
      %277 = vdwg.mxu0
      %v279 = vsel %vm248, %v225, 0
      %v282 = vsel %vm248, %v226, 0
      %284 = vmatpush.msra.mxu0 0.0
      %285 = vmatpush.msra.mxu0 0.0
      %286 = vmatpush.msra.mxu0 0.0
      %287 = vmatpush.msra.mxu0 0.0
      %288 = vmatpush.msra.mxu0 0.0
      %289 = vmatpush.msra.mxu0 0.0
      %290 = vmatpush.msra.mxu0 0.0
      %291 = vmatpush.msra.mxu0 %v235
      %292 = vmatpush.msra.mxu0 %v234
      %293 = vmatpush.msra.mxu0 %v233
      %294 = vmatpush.msra.mxu0 %v232
      %295 = vmatpush.msra.mxu0 %v231
      %296 = vmatpush.msra.mxu0 %v230
      %297 = vmatpush.msra.mxu0 %v229
      %298 = vmatpush.msra.mxu0 %v228
      %299 = vmatpush.msra.mxu0 %v227
      %300 = vmatmul.f32.gmra.mxu0 %v279
      %v301 = vpop.f32.mrf.mxu0
      %v302 = vadd.f32 %v273, %v301
      %303 = vmatmul.f32.gmra.mxu0 %v282
      %v304 = vpop.f32.mrf.mxu0
      %v305 = vadd.f32 %v276, %v304
      %306 = vdwg.mxu0
      %v307 = vld [vmem:[%s219 + $0x2] sm:$0xff]
      %v308 = vld [vmem:[%s219 + $0xa] sm:$0xff]
      %s309 = scalar_lea.vmem %s1, 144
      %v310 = vld [vmem:[%s309] sm:$0xff]
      %v311 = vld [vmem:[%s309 + $0x8] sm:$0xff]
      %v312 = vld [vmem:[%s309 + $0x10] sm:$0xff]
      %v313 = vld [vmem:[%s309 + $0x18] sm:$0xff]
      %v314 = vld [vmem:[%s309 + $0x20] sm:$0xff]
      %v315 = vld [vmem:[%s309 + $0x28] sm:$0xff]
      %v316 = vld [vmem:[%s309 + $0x30] sm:$0xff]
      %v317 = vld [vmem:[%s309 + $0x38] sm:$0xff]
      %v318 = vld [vmem:[%s309 + $0x40] sm:$0xff]
      %v320 = vsel %vm248, %v307, 0
      %v323 = vsel %vm248, %v308, 0
      %325 = vmatpush.msra.mxu0 0.0
      %326 = vmatpush.msra.mxu0 0.0
      %327 = vmatpush.msra.mxu0 0.0
      %328 = vmatpush.msra.mxu0 0.0
      %329 = vmatpush.msra.mxu0 0.0
      %330 = vmatpush.msra.mxu0 0.0
      %331 = vmatpush.msra.mxu0 0.0
      %332 = vmatpush.msra.mxu0 %v318
      %333 = vmatpush.msra.mxu0 %v317
      %334 = vmatpush.msra.mxu0 %v316
      %335 = vmatpush.msra.mxu0 %v315
      %336 = vmatpush.msra.mxu0 %v314
      %337 = vmatpush.msra.mxu0 %v313
      %338 = vmatpush.msra.mxu0 %v312
      %339 = vmatpush.msra.mxu0 %v311
      %340 = vmatpush.msra.mxu0 %v310
      %341 = vmatmul.f32.gmra.mxu0 %v320
      %v342 = vpop.f32.mrf.mxu0
      %v343 = vadd.f32 0.0, %v342
      %344 = vmatmul.f32.gmra.mxu0 %v323
      %v345 = vpop.f32.mrf.mxu0
      %v346 = vadd.f32 0.0, %v345
      %347 = vdwg.mxu0
      %v348 = vadd.f32 %v302, %v343
      %v349 = vadd.f32 %v305, %v346
      %v350 = vld [vmem:[%s2] sm:$0x1]
      %v352 = vperm.slane %v350, 0
      %v354 = vadd.f32 %v348, %v352
      %v355 = vadd.f32 %v349, %v352
      %v356 = vmax.f32 %v354, 0.0
      %v357 = vmax.f32 %v355, 0.0
      %358 = vst [vmem:[#allocation2] sm:$0xff] 0.0
      %vm359 = vcmask 130048
      %360 = vst.msk [vmem:[#allocation2 + $0x8] sm:$0xff] %vm359, 0.0
      %361 = vst [vmem:[#allocation2 + $0x10] sm:$0xff] 0.0
      %362 = vst.msk [vmem:[#allocation2 + $0x18] sm:$0xff] %vm359, 0.0
      %363 = vst [vmem:[#allocation2 + $0x20] sm:$0x3] 0.0
      %vm364 = vcmask 123904
      %365 = vst.msk [vmem:[#allocation2 + $0x28] sm:$0x3] %vm364, 0.0
      %vm368 = vcmask 1040384
      %v369 = vrot.slane %v356, 7
      %v370 = vrot.slane %v357, 7
      %v371 = vsel %vm368, %v369, %v370
      %375 = vst [vmem:[#allocation2] sm:$0xfe] %v369
      %376 = vst [vmem:[#allocation2 + $0x10] sm:$0xff] %v371
      %377 = vst [vmem:[#allocation2 + $0x20] sm:$0x1] %v370
      %v378 = vld [vmem:[#allocation2] sm:$0xff]
      %v379 = vld [vmem:[#allocation2 + $0x8] sm:$0xff]
      %v380 = vld [vmem:[#allocation2 + $0x10] sm:$0xff]
      %v381 = vld [vmem:[#allocation2 + $0x18] sm:$0xff]
      %v382 = vld [vmem:[%s3] sm:$0xff]
      %v383 = vld [vmem:[%s3 + $0x8] sm:$0xff]
      %v384 = vld [vmem:[%s3 + $0x10] sm:$0xff]
      %v385 = vld [vmem:[%s3 + $0x18] sm:$0xff]
      %v386 = vld [vmem:[%s3 + $0x20] sm:$0xff]
      %v387 = vld [vmem:[%s3 + $0x28] sm:$0xff]
      %v388 = vld [vmem:[%s3 + $0x30] sm:$0xff]
      %v389 = vld [vmem:[%s3 + $0x38] sm:$0xff]
      %v390 = vld [vmem:[%s3 + $0x40] sm:$0xff]
      %v391 = vld [vmem:[%s3 + $0x48] sm:$0xff]
      %v392 = vld [vmem:[%s3 + $0x50] sm:$0xff]
      %v393 = vld [vmem:[%s3 + $0x58] sm:$0xff]
      %v394 = vld [vmem:[%s3 + $0x60] sm:$0xff]
      %v395 = vld [vmem:[%s3 + $0x68] sm:$0xff]
      %v396 = vld [vmem:[%s3 + $0x70] sm:$0xff]
      %v397 = vld [vmem:[%s3 + $0x78] sm:$0xff]
      %v398 = vld [vmem:[%s3 + $0x80] sm:$0xff]
      %v399 = vld [vmem:[%s3 + $0x88] sm:$0xff]
      %v400 = vld [vmem:[#allocation2] sm:$0xfe]
      %v401 = vld [vmem:[#allocation2 + $0x8] sm:$0xfe]
      %v402 = vld [vmem:[#allocation2 + $0x20] sm:$0x1]
      %v403 = vld [vmem:[#allocation2 + $0x28] sm:$0x1]
      %s404 = scalar_lea.vmem %s3, 144
      %v405 = vld [vmem:[%s404] sm:$0xff]
      %v406 = vld [vmem:[%s404 + $0x8] sm:$0xff]
      %v407 = vld [vmem:[%s404 + $0x10] sm:$0xff]
      %v408 = vld [vmem:[%s404 + $0x18] sm:$0xff]
      %v409 = vld [vmem:[%s404 + $0x20] sm:$0xff]
      %v410 = vld [vmem:[%s404 + $0x28] sm:$0xff]
      %v411 = vld [vmem:[%s404 + $0x30] sm:$0xff]
      %v412 = vld [vmem:[%s404 + $0x38] sm:$0xff]
      %v413 = vld [vmem:[%s404 + $0x40] sm:$0xff]
      %v414 = vld [vmem:[%s404 + $0x48] sm:$0xff]
      %v415 = vld [vmem:[%s404 + $0x50] sm:$0xff]
      %v416 = vld [vmem:[%s404 + $0x58] sm:$0xff]
      %v417 = vld [vmem:[%s404 + $0x60] sm:$0xff]
      %v418 = vld [vmem:[%s404 + $0x68] sm:$0xff]
      %v419 = vld [vmem:[%s404 + $0x70] sm:$0xff]
      %v420 = vld [vmem:[%s404 + $0x78] sm:$0xff]
      %v421 = vld [vmem:[%s404 + $0x80] sm:$0xff]
      %v422 = vld [vmem:[%s404 + $0x88] sm:$0xff]
      %vm429 = vcmask 1046528
      %v430 = vrot.slane %v400, 1
      %v431 = vrot.slane %v380, 1
      %v432 = vsel %vm429, %v430, %v431
      %v433 = vrot.slane %v401, 1
      %v434 = vrot.slane %v381, 1
      %v435 = vsel %vm429, %v433, %v434
      %v436 = vrot.slane %v402, 1
      %v437 = vsel %vm429, %v431, %v436
      %v438 = vrot.slane %v403, 1
      %v439 = vsel %vm429, %v434, %v438
      %v442 = vsel %vm359, %v435, 0
      %v444 = vsel %vm359, %v439, 0
      %446 = vmatpush.msra.mxu0 %v420
      %447 = vmatpush.msra.mxu0 %v419
      %448 = vmatpush.msra.mxu0 %v418
      %449 = vmatpush.msra.mxu0 %v417
      %450 = vmatpush.msra.mxu0 %v416
      %451 = vmatpush.msra.mxu0 %v415
      %452 = vmatpush.msra.mxu0 %v414
      %453 = vmatpush.msra.mxu0 %v413
      %454 = vmatpush.msra.mxu0 %v412
      %455 = vmatpush.msra.mxu0 %v411
      %456 = vmatpush.msra.mxu0 %v410
      %457 = vmatpush.msra.mxu0 %v409
      %458 = vmatpush.msra.mxu0 %v408
      %459 = vmatpush.msra.mxu0 %v407
      %460 = vmatpush.msra.mxu0 %v406
      %461 = vmatpush.msra.mxu0 %v405
      %462 = vmatmul.f32.gmra.mxu0 %v432
      %v463 = vpop.f32.mrf.mxu0
      %v464 = vadd.f32 0.0, %v463
      %465 = vmatmul.f32.gmra.mxu0 %v437
      %v466 = vpop.f32.mrf.mxu0
      %v467 = vadd.f32 0.0, %v466
      %468 = vdwg.mxu0
      %469 = vmatpush.msra.mxu0 0.0
      %470 = vmatpush.msra.mxu0 0.0
      %471 = vmatpush.msra.mxu0 0.0
      %472 = vmatpush.msra.mxu0 0.0
      %473 = vmatpush.msra.mxu0 0.0
      %474 = vmatpush.msra.mxu0 0.0
      %475 = vmatpush.msra.mxu0 0.0
      %476 = vmatpush.msra.mxu0 0.0
      %477 = vmatpush.msra.mxu0 0.0
      %478 = vmatpush.msra.mxu0 0.0
      %479 = vmatpush.msra.mxu0 0.0
      %480 = vmatpush.msra.mxu0 0.0
      %481 = vmatpush.msra.mxu0 0.0
      %482 = vmatpush.msra.mxu0 0.0
      %483 = vmatpush.msra.mxu0 %v422
      %484 = vmatpush.msra.mxu0 %v421
      %485 = vmatmul.f32.gmra.mxu0 %v442
      %v486 = vpop.f32.mrf.mxu0
      %v487 = vadd.f32 %v464, %v486
      %488 = vmatmul.f32.gmra.mxu0 %v444
      %v489 = vpop.f32.mrf.mxu0
      %v490 = vadd.f32 %v467, %v489
      %491 = vdwg.mxu0
      %v493 = vsel %vm359, %v379, 0
      %v495 = vsel %vm359, %v381, 0
      %497 = vmatpush.msra.mxu0 %v397
      %498 = vmatpush.msra.mxu0 %v396
      %499 = vmatpush.msra.mxu0 %v395
      %500 = vmatpush.msra.mxu0 %v394
      %501 = vmatpush.msra.mxu0 %v393
      %502 = vmatpush.msra.mxu0 %v392
      %503 = vmatpush.msra.mxu0 %v391
      %504 = vmatpush.msra.mxu0 %v390
      %505 = vmatpush.msra.mxu0 %v389
      %506 = vmatpush.msra.mxu0 %v388
      %507 = vmatpush.msra.mxu0 %v387
      %508 = vmatpush.msra.mxu0 %v386
      %509 = vmatpush.msra.mxu0 %v385
      %510 = vmatpush.msra.mxu0 %v384
      %511 = vmatpush.msra.mxu0 %v383
      %512 = vmatpush.msra.mxu0 %v382
      %513 = vmatmul.f32.gmra.mxu0 %v378
      %v514 = vpop.f32.mrf.mxu0
      %v515 = vadd.f32 %v487, %v514
      %516 = vmatmul.f32.gmra.mxu0 %v380
      %v517 = vpop.f32.mrf.mxu0
      %v518 = vadd.f32 %v490, %v517
      %519 = vdwg.mxu0
      %520 = vmatpush.msra.mxu0 0.0
      %521 = vmatpush.msra.mxu0 0.0
      %522 = vmatpush.msra.mxu0 0.0
      %523 = vmatpush.msra.mxu0 0.0
      %524 = vmatpush.msra.mxu0 0.0
      %525 = vmatpush.msra.mxu0 0.0
      %526 = vmatpush.msra.mxu0 0.0
      %527 = vmatpush.msra.mxu0 0.0
      %528 = vmatpush.msra.mxu0 0.0
      %529 = vmatpush.msra.mxu0 0.0
      %530 = vmatpush.msra.mxu0 0.0
      %531 = vmatpush.msra.mxu0 0.0
      %532 = vmatpush.msra.mxu0 0.0
      %533 = vmatpush.msra.mxu0 0.0
      %534 = vmatpush.msra.mxu0 %v399
      %535 = vmatpush.msra.mxu0 %v398
      %536 = vmatmul.f32.gmra.mxu0 %v493
      %v537 = vpop.f32.mrf.mxu0
      %v538 = vadd.f32 %v515, %v537
      %539 = vmatmul.f32.gmra.mxu0 %v495
      %v540 = vpop.f32.mrf.mxu0
      %v541 = vadd.f32 %v518, %v540
      %542 = vdwg.mxu0
      %v543 = vld [vmem:[#allocation2] sm:$0xfc]
      %v544 = vld [vmem:[#allocation2 + $0x8] sm:$0xfc]
      %v545 = vld [vmem:[#allocation2 + $0x20] sm:$0x3]
      %v546 = vld [vmem:[#allocation2 + $0x28] sm:$0x3]
      %s547 = scalar_lea.vmem %s3, 288
      %v548 = vld [vmem:[%s547] sm:$0xff]
      %v549 = vld [vmem:[%s547 + $0x8] sm:$0xff]
      %v550 = vld [vmem:[%s547 + $0x10] sm:$0xff]
      %v551 = vld [vmem:[%s547 + $0x18] sm:$0xff]
      %v552 = vld [vmem:[%s547 + $0x20] sm:$0xff]
      %v553 = vld [vmem:[%s547 + $0x28] sm:$0xff]
      %v554 = vld [vmem:[%s547 + $0x30] sm:$0xff]
      %v555 = vld [vmem:[%s547 + $0x38] sm:$0xff]
      %v556 = vld [vmem:[%s547 + $0x40] sm:$0xff]
      %v557 = vld [vmem:[%s547 + $0x48] sm:$0xff]
      %v558 = vld [vmem:[%s547 + $0x50] sm:$0xff]
      %v559 = vld [vmem:[%s547 + $0x58] sm:$0xff]
      %v560 = vld [vmem:[%s547 + $0x60] sm:$0xff]
      %v561 = vld [vmem:[%s547 + $0x68] sm:$0xff]
      %v562 = vld [vmem:[%s547 + $0x70] sm:$0xff]
      %v563 = vld [vmem:[%s547 + $0x78] sm:$0xff]
      %v564 = vld [vmem:[%s547 + $0x80] sm:$0xff]
      %v565 = vld [vmem:[%s547 + $0x88] sm:$0xff]
      %vm570 = vcmask 1045504
      %v571 = vrot.slane %v543, 2
      %v572 = vrot.slane %v380, 2
      %v573 = vsel %vm570, %v571, %v572
      %v574 = vrot.slane %v544, 2
      %v575 = vrot.slane %v381, 2
      %v576 = vsel %vm570, %v574, %v575
      %v577 = vrot.slane %v545, 2
      %v578 = vsel %vm570, %v572, %v577
      %v579 = vrot.slane %v546, 2
      %v580 = vsel %vm570, %v575, %v579
      %v583 = vsel %vm359, %v576, 0
      %v585 = vsel %vm359, %v580, 0
      %587 = vmatpush.msra.mxu0 %v563
      %588 = vmatpush.msra.mxu0 %v562
      %589 = vmatpush.msra.mxu0 %v561
      %590 = vmatpush.msra.mxu0 %v560
      %591 = vmatpush.msra.mxu0 %v559
      %592 = vmatpush.msra.mxu0 %v558
      %593 = vmatpush.msra.mxu0 %v557
      %594 = vmatpush.msra.mxu0 %v556
      %595 = vmatpush.msra.mxu0 %v555
      %596 = vmatpush.msra.mxu0 %v554
      %597 = vmatpush.msra.mxu0 %v553
      %598 = vmatpush.msra.mxu0 %v552
      %599 = vmatpush.msra.mxu0 %v551
      %600 = vmatpush.msra.mxu0 %v550
      %601 = vmatpush.msra.mxu0 %v549
      %602 = vmatpush.msra.mxu0 %v548
      %603 = vmatmul.f32.gmra.mxu0 %v573
      %v604 = vpop.f32.mrf.mxu0
      %v605 = vadd.f32 0.0, %v604
      %606 = vmatmul.f32.gmra.mxu0 %v578
      %v607 = vpop.f32.mrf.mxu0
      %v608 = vadd.f32 0.0, %v607
      %609 = vdwg.mxu0
      %610 = vmatpush.msra.mxu0 0.0
      %611 = vmatpush.msra.mxu0 0.0
      %612 = vmatpush.msra.mxu0 0.0
      %613 = vmatpush.msra.mxu0 0.0
      %614 = vmatpush.msra.mxu0 0.0
      %615 = vmatpush.msra.mxu0 0.0
      %616 = vmatpush.msra.mxu0 0.0
      %617 = vmatpush.msra.mxu0 0.0
      %618 = vmatpush.msra.mxu0 0.0
      %619 = vmatpush.msra.mxu0 0.0
      %620 = vmatpush.msra.mxu0 0.0
      %621 = vmatpush.msra.mxu0 0.0
      %622 = vmatpush.msra.mxu0 0.0
      %623 = vmatpush.msra.mxu0 0.0
      %624 = vmatpush.msra.mxu0 %v565
      %625 = vmatpush.msra.mxu0 %v564
      %626 = vmatmul.f32.gmra.mxu0 %v583
      %v627 = vpop.f32.mrf.mxu0
      %v628 = vadd.f32 %v605, %v627
      %629 = vmatmul.f32.gmra.mxu0 %v585
      %v630 = vpop.f32.mrf.mxu0
      %v631 = vadd.f32 %v608, %v630
      %632 = vdwg.mxu0
      %v633 = vadd.f32 %v538, %v628
      %v634 = vadd.f32 %v541, %v631
      %v635 = vld [vmem:[%s4] sm:$0x1]
      %v637 = vperm.slane %v635, 0
      %v639 = vadd.f32 %v633, %v637
      %v640 = vadd.f32 %v634, %v637
      %v641 = vmax.f32 %v639, 0.0
      %v642 = vmax.f32 %v640, 0.0
      %643 = vst [vmem:[%s224] sm:$0xff] %v641
      %644 = vst [vmem:[%s224 + $0x8] sm:$0xff] %v642
      %p645 = scmp.lt.s32.totalorder %s16, 1
      %s646 = scalar_select %p645, %s16, 1
      %s647 = smul.addr %s646, 2
      %s648 = smul.addr %s647, 8
      %s649 = scalar_lea.vmem %s5, %s648
      // Predicated region
      $region41: #{double_conv_forward.1} parent=39 // pred_check
        %p650 = pneg %p144
      $region42: #{double_conv_forward.1} parent=39 // pred_check_branch
        %652 = sbr.rel (%p650) target = $region44
      $region43: #{double_conv_forward.1} parent=39 // pred_region
        _
      $region44: #{double_conv_forward.1} parent=39 // pred_fallthru
        _
    $region40: #{double_conv_forward.1} parent=5 // pred_fallthru
      _
    %p653 = scmp.le.s32.totalorder 2, %s11
    // Predicated region
    $region45: #{double_conv_forward.1} parent=5 // pred_check
      %p654 = pneg %p653
    $region46: #{double_conv_forward.1} parent=5 // pred_check_branch
      %656 = sbr.rel (%p654) target = $region48
    $region47: #{double_conv_forward.1} parent=5 // pred_region
      %s657 = ssub.s32 %s11, 2
      // Predicated region
      $region49: #{double_conv_forward.1} parent=47 // pred_check
        %p658 = pneg %p150
      $region50: #{double_conv_forward.1} parent=47 // pred_check_branch
        %660 = sbr.rel (%p658) target = $region52
      $region51: #{double_conv_forward.1} parent=47 // pred_region
        %p661 = scmp.lt.s32.totalorder %s17, 1
        %s662 = scalar_select %p661, %s17, 1
        %s663 = smul.addr %s662, 2
        %s664 = smul.addr %s663, 8
        %s665 = scalar_lea.vmem %s5, %s664
      $region52: #{double_conv_forward.1} parent=47 // pred_fallthru
        _
    $region48: #{double_conv_forward.1} parent=5 // pred_fallthru
      _
  $region6: #{double_conv_forward.1} parent=0 // loop_footer
    %s15 = sadd.s32 1, %s11
  $region7: #{double_conv_forward.1} parent=0 // loop_footer_branch
    %10 = sbr.rel target = $region3
  $region8: #{double_conv_forward.1} parent=0 // loop_exit
    _

</llo_original>
